<compile_context>
chip_gen: v7x
topology: tpu7x:2x2x1
jax: 0.10.0
libtpu: 0.0.40
codegen_flags: <defaults>
</compile_context>

<pallas_src>
import functools

import numpy as np
import jax
import jax.numpy as jnp
from jax.experimental import pallas as pl
from jax.experimental.pallas import tpu as pltpu

BN_EPS = 1e-3
LANE = 128


def _round_up(v, m):
    return (v + m - 1) // m * m


def _pick_tile(p, max_tile, align):
    """Largest multiple of `align` that divides `p` and is <= max_tile.

    `p` must itself be a multiple of `align`."""
    t = min(p, max_tile)
    t = (t // align) * align
    while p % t:
        t -= align
    return t


# ----------------------------------------------------------------------------
# Kernel A: tiled matmul + bias + activation, optionally fused with a
#           per-(batch, K) SE scale on the input and a residual add.
# ----------------------------------------------------------------------------
def _fused_matmul_kernel(*refs, has_se, has_shortcut, act):
    x_ref, w_ref, b_ref = refs[0], refs[1], refs[2]
    idx = 3
    se_ref = sc_ref = None
    if has_se:
        se_ref = refs[idx]; idx += 1
    if has_shortcut:
        sc_ref = refs[idx]; idx += 1
    o_ref, acc_ref = refs[idx], refs[idx + 1]

    k = pl.program_id(3)

    @pl.when(k == 0)
    def _():
        acc_ref[...] = jnp.zeros_like(acc_ref)

    xt = x_ref[0]                                  # (tm, tk) bf16
    if has_se:
        # SE channel-scale fused on the input rows (f32 mul, bf16 to the MXU).
        xt = (xt.astype(jnp.float32) * se_ref[0].astype(jnp.float32)
              ).astype(jnp.bfloat16)
    acc_ref[...] += jnp.dot(xt, w_ref[...], preferred_element_type=jnp.float32)

    @pl.when(k == pl.num_programs(3) - 1)
    def _():
        y = acc_ref[...] + b_ref[...]              # f32 epilogue (v5e friendly)
        if act == "swish":
            y = y * jax.nn.sigmoid(y)
        elif act == "sigmoid":
            y = jax.nn.sigmoid(y)
        if has_shortcut:
            y = y + sc_ref[0].astype(jnp.float32)
        o_ref[0] = y.astype(o_ref.dtype)


def fused_matmul(x, w, bias, *, act=None, se=None, shortcut=None,
                 out_dtype=jnp.bfloat16, tm_max=256, tn_max=512, tk_max=512):
    """out[b] = act(x[b] (* se[b]) @ w + bias) (+ shortcut[b]).

    x: (B, M, K)   w: (K, N) bf16   bias: (N,) f32
    se: (B, K) f32 or None          shortcut: (B, M, N) or None
    """
    B, M, K = x.shape
    N = w.shape[1]
    Mp, Kp, Np = _round_up(M, 8), _round_up(K, LANE), _round_up(N, LANE)
    tm = _pick_tile(Mp, tm_max, 8)
    tk = _pick_tile(Kp, tk_max, LANE)
    tn = _pick_tile(Np, tn_max, LANE)

    xb = x.astype(jnp.bfloat16)
    if (Mp, Kp) != (M, K):
        xb = jnp.pad(xb, ((0, 0), (0, Mp - M), (0, Kp - K)))
    wb = w.astype(jnp.bfloat16)
    if (Kp, Np) != (K, N):
        wb = jnp.pad(wb, ((0, Kp - K), (0, Np - N)))
    b2 = bias.astype(jnp.float32).reshape(1, N)
    if Np != N:
        b2 = jnp.pad(b2, ((0, 0), (0, Np - N)))

    has_se = se is not None
    has_sc = shortcut is not None

    inputs = [xb, wb, b2]
    in_specs = [
        pl.BlockSpec((1, tm, tk), lambda b, i, j, k: (b, i, k)),
        pl.BlockSpec((tk, tn), lambda b, i, j, k: (k, j)),
        pl.BlockSpec((1, tn), lambda b, i, j, k: (0, j)),
    ]
    if has_se:
        seb = se.astype(jnp.float32).reshape(B, 1, K)
        if Kp != K:
            seb = jnp.pad(seb, ((0, 0), (0, 0), (0, Kp - K)))
        inputs.append(seb)
        in_specs.append(pl.BlockSpec((1, 1, tk), lambda b, i, j, k: (b, 0, k)))
    if has_sc:
        scb = shortcut.astype(jnp.bfloat16)
        if (Mp, Np) != (M, N):
            scb = jnp.pad(scb, ((0, 0), (0, Mp - M), (0, Np - N)))
        inputs.append(scb)
        in_specs.append(pl.BlockSpec((1, tm, tn), lambda b, i, j, k: (b, i, j)))

    bytes_accessed = (sum(int(a.size) * a.dtype.itemsize for a in inputs)
                      + int(B * Mp * Np) * np.dtype(out_dtype).itemsize)
    cost = pl.CostEstimate(
        flops=int(2 * B * Mp * Np * Kp),
        transcendentals=int(B * Mp * Np) if act in ("swish", "sigmoid") else 0,
        bytes_accessed=int(bytes_accessed))

    out = pl.pallas_call(
        functools.partial(_fused_matmul_kernel, has_se=has_se,
                          has_shortcut=has_sc, act=act),
        out_shape=jax.ShapeDtypeStruct((B, Mp, Np), out_dtype),
        grid=(B, Mp // tm, Np // tn, Kp // tk),
        in_specs=in_specs,
        out_specs=pl.BlockSpec((1, tm, tn), lambda b, i, j, k: (b, i, j)),
        scratch_shapes=[pltpu.VMEM((tm, tn), jnp.float32)],
        compiler_params=pltpu.CompilerParams(
            dimension_semantics=("parallel", "parallel", "parallel",
                                 "arbitrary")),
        cost_estimate=cost,
    )(*inputs)

    if (Mp, Np) != (M, N):
        out = out[:, :M, :N]
    return out


# ----------------------------------------------------------------------------
# Kernel B: depthwise KxK conv (stride 1, same pad) + folded BN + Swish,
#           with the SE global-average-pool fused as an epilogue output.
# ----------------------------------------------------------------------------
def _dw_gap_kernel(x_ref, w_ref, b_ref, o_ref, p_ref, *, ksize, H, W):
    xv = x_ref[0].astype(jnp.float32)              # (Hp, Wp, tc)
    wv = w_ref[...].astype(jnp.float32)            # (k*k, tc)
    C = xv.shape[-1]
    acc = jnp.zeros((H, W, C), jnp.float32)
    # Only k sublane-shifted (W-axis) copies; the kh shift is along the major
    # axis and is reused across all kh taps.
    for kw in range(ksize):
        xw = xv[:, kw:kw + W, :]                   # (Hp, W, tc)
        for kh in range(ksize):
            acc = acc + xw[kh:kh + H] * wv[kh * ksize + kw]
    y = acc + b_ref[...]
    y = y * jax.nn.sigmoid(y)                      # Swish (f32 epilogue)
    o_ref[0] = y.astype(o_ref.dtype)
    # Fused SE squeeze: per-(batch, channel-tile) spatial mean.
    p_ref[...] = jnp.sum(jnp.sum(y, axis=0), axis=0, keepdims=True) * (1.0 / (H * W))


def depthwise_bn_swish_gap(x, w, bias, ksize):
    """Returns (activation (N,H,W,C) bf16, pooled mean (N,C) f32)."""
    # TODO(synk): for large resolutions also tile H with halo exchange; at the
    # shapes used here one (Hp, Wp, tc) block per (batch, channel-tile) fits.
    N, H, W, C = x.shape                           # C is a multiple of 128
    pad = ksize // 2
    xp = jnp.pad(x, ((0, 0), (pad, pad), (pad, pad), (0, 0)))
    Hp, Wp = H + 2 * pad, W + 2 * pad
    tc = _pick_tile(C, 256, LANE)

    cost = pl.CostEstimate(
        flops=int(2 * N * H * W * C * ksize * ksize),
        transcendentals=int(N * H * W * C),
        bytes_accessed=int(xp.size * xp.dtype.itemsize + w.size * 4 + C * 4
                           + N * H * W * C * 2 + N * C * 4))

    y, pooled = pl.pallas_call(
        functools.partial(_dw_gap_kernel, ksize=ksize, H=H, W=W),
        out_shape=(jax.ShapeDtypeStruct((N, H, W, C), jnp.bfloat16),
                   jax.ShapeDtypeStruct((N, C), jnp.float32)),
        grid=(N, C // tc),
        in_specs=[
            pl.BlockSpec((1, Hp, Wp, tc), lambda n, c: (n, 0, 0, c)),
            pl.BlockSpec((ksize * ksize, tc), lambda n, c: (0, c)),
            pl.BlockSpec((1, tc), lambda n, c: (0, c)),
        ],
        out_specs=[pl.BlockSpec((1, H, W, tc), lambda n, c: (n, 0, 0, c)),
                   pl.BlockSpec((1, tc), lambda n, c: (n, c))],
        compiler_params=pltpu.CompilerParams(
            dimension_semantics=("parallel", "parallel")),
        cost_estimate=cost,
    )(xp, w, bias.reshape(1, C))
    return y, pooled


# ----------------------------------------------------------------------------
# Kernel C: fused SE excitation: sigmoid(swish(pooled @ W1 + b1) @ W2 + b2),
#           tiled over the hidden dim with a resident f32 accumulator.
# ----------------------------------------------------------------------------
def _se_kernel(p_ref, w1_ref, b1_ref, w2_ref, b2_ref, o_ref, acc_ref):
    j = pl.program_id(0)

    @pl.when(j == 0)
    def _():
        acc_ref[...] = jnp.zeros_like(acc_ref)

    h = jnp.dot(p_ref[...].astype(jnp.bfloat16), w1_ref[...],
                preferred_element_type=jnp.float32) + b1_ref[...]
    h = h * jax.nn.sigmoid(h)                      # Swish
    acc_ref[...] += jnp.dot(h.astype(jnp.bfloat16), w2_ref[...],
                            preferred_element_type=jnp.float32)

    @pl.when(j == pl.num_programs(0) - 1)
    def _():
        o_ref[...] = jax.nn.sigmoid(acc_ref[...] + b2_ref[...])


def se_excite(pooled, w1, b1, w2, b2):
    """pooled: (B, C) f32 -> SE scale (B, C) f32."""
    B, C = pooled.shape                            # C multiple of 128
    Hd = w1.shape[1]                               # multiple of 128
    th = _pick_tile(Hd, 256, LANE)
    return pl.pallas_call(
        _se_kernel,
        out_shape=jax.ShapeDtypeStruct((B, C), jnp.float32),
        grid=(Hd // th,),
        in_specs=[
            pl.BlockSpec((B, C), lambda j: (0, 0)),
            pl.BlockSpec((C, th), lambda j: (0, j)),
            pl.BlockSpec((1, th), lambda j: (0, j)),
            pl.BlockSpec((th, C), lambda j: (j, 0)),
            pl.BlockSpec((1, C), lambda j: (0, 0)),
        ],
        out_specs=pl.BlockSpec((B, C), lambda j: (0, 0)),
        scratch_shapes=[pltpu.VMEM((B, C), jnp.float32)],
        compiler_params=pltpu.CompilerParams(
            dimension_semantics=("arbitrary",)),
    )(pooled, w1, b1.reshape(1, Hd), w2, b2.reshape(1, C))


# ----------------------------------------------------------------------------
# Kernel D: global average pool for the head (AdaptiveAvgPool2d((1,1))).
# ----------------------------------------------------------------------------
def _gap_kernel(x_ref, o_ref, *, inv_hw):
    o_ref[...] = jnp.sum(x_ref[0].astype(jnp.float32), axis=0,
                         keepdims=True) * inv_hw


def global_avg_pool(x):
    N, H, W, C = x.shape
    x3 = x.reshape(N, H * W, C)
    tc = _pick_tile(C, 512, LANE)
    return pl.pallas_call(
        functools.partial(_gap_kernel, inv_hw=1.0 / float(H * W)),
        out_shape=jax.ShapeDtypeStruct((N, C), jnp.float32),
        grid=(N, C // tc),
        in_specs=[pl.BlockSpec((1, H * W, tc), lambda n, c: (n, 0, c))],
        out_specs=pl.BlockSpec((1, tc), lambda n, c: (n, c)),
        compiler_params=pltpu.CompilerParams(
            dimension_semantics=("parallel", "parallel")),
    )(x3)


# ----------------------------------------------------------------------------
# Network building blocks (glue around the Pallas kernels)
# ----------------------------------------------------------------------------
def pointwise(x, w, bias, act=None):
    """1x1 conv (stride 1) + folded BN + activation via the tiled matmul."""
    N, H, W, C = x.shape
    Cout = w.shape[1]
    y = fused_matmul(x.reshape(1, N * H * W, C), w, bias, act=act)
    return y.reshape(N, H, W, Cout)


def stem_conv(x, p):
    """stage1: 3x3 conv stride 2 pad 1 (no bias) + BN, via im2col + matmul."""
    # TODO(synk): build the im2col gather inside the matmul kernel (shifted
    # in-VMEM loads) to avoid the XLA-side 9x expanded copy at large inputs.
    N, H, W, C = x.shape
    Ho, Wo = (H + 1) // 2, (W + 1) // 2
    xp = jnp.pad(x, ((0, 0), (1, 1), (1, 1), (0, 0)))
    cols = [xp[:, kh:kh + 2 * Ho:2, kw:kw + 2 * Wo:2, :]
            for kh in range(3) for kw in range(3)]
    xcol = jnp.concatenate(cols, axis=-1).reshape(1, N * Ho * Wo, 9 * C)
    y = fused_matmul(xcol, p["w"], p["b"], act=None)
    return y.reshape(N, Ho, Wo, p["w"].shape[1])


def mbconv_block(x, blk):
    p, k, stride = blk["params"], blk["k"], blk["stride"]
    # PyTorch reference puts the stride on the 1x1 expand conv; a strided 1x1
    # conv == subsampling the input then a stride-1 1x1 conv.
    xin = x[:, ::stride, ::stride, :] if stride > 1 else x
    N, H, W, _ = xin.shape
    h = pointwise(xin, p["expand_w"], p["expand_b"], act="swish")
    h, pooled = depthwise_bn_swish_gap(h, p["dw_w"], p["dw_b"], ksize=k)
    se = p["se"]
    s = se_excite(pooled, se["w1"], se["b1"], se["w2"], se["b2"])
    Cexp = h.shape[-1]
    Cout = p["proj_w"].shape[1]
    sc = x.reshape(N, H * W, Cout) if blk["shortcut"] else None
    y = fused_matmul(h.reshape(N, H * W, Cexp), p["proj_w"], p["proj_b"],
                     act=None, se=s, shortcut=sc)
    return y.reshape(N, H, W, Cout)


def sepconv_block(x, blk):
    p, k = blk["params"], blk["k"]
    N, H, W, C = x.shape
    h, pooled = depthwise_bn_swish_gap(x, p["dw_w"], p["dw_b"], ksize=k)
    se = p["se"]
    s = se_excite(pooled, se["w1"], se["b1"], se["w2"], se["b2"])
    Cout = p["proj_w"].shape[1]
    sc = x.reshape(N, H * W, C) if blk["shortcut"] else None
    y = fused_matmul(h.reshape(N, H * W, C), p["proj_w"], p["proj_b"],
                     act=None, se=s, shortcut=sc)
    return y.reshape(N, H, W, Cout)


def efficientnet_forward(x_nhwc, params):
    # nn.Upsample(scale_factor=1.0, mode='bilinear') is an exact identity.
    h = stem_conv(x_nhwc.astype(jnp.bfloat16), params["stage1"])
    for blocks in params["stages"]:
        for blk in blocks:
            h = sepconv_block(h, blk) if blk["kind"] == "sep" else mbconv_block(h, blk)
    p9 = params["stage9"]
    h = pointwise(h, p9["w"], p9["b"], act="swish")
    pooled = global_avg_pool(h)                    # (N, 1280) f32
    # Dropout: identity in eval mode.
    lin = params["linear"]
    logits = fused_matmul(pooled.reshape(1, pooled.shape[0], -1),
                          lin["w"], lin["b"], act=None, out_dtype=jnp.float32)
    return logits[0, :, :lin["n"]]


# ----------------------------------------------------------------------------
# Deterministic synthetic parameters (logical shapes match the PyTorch module;
# BN folded into the conv weights/bias, channel dims zero-padded to 128).
# ----------------------------------------------------------------------------
def init_params(key, num_classes=10):
    channels = [32, 16, 24, 40, 80, 112, 192, 320, 1280]
    repeats = [1, 2, 2, 3, 3, 4, 1]
    strides_cfg = [1, 2, 2, 2, 1, 2, 1]
    ksizes = [3, 3, 5, 3, 5, 5, 3]

    keys = iter(jax.random.split(key, 2048))
    nk = lambda: next(keys)

    def conv_w(shape, fan_in):
        return jax.random.normal(nk(), shape, jnp.float32) / jnp.sqrt(float(fan_in))

    def bn(c):  # fold eval-mode BatchNorm into (scale, bias)
        gamma = 1.0 + 0.1 * jax.random.normal(nk(), (c,), jnp.float32)
        beta = 0.1 * jax.random.normal(nk(), (c,), jnp.float32)
        mean = 0.1 * jax.random.normal(nk(), (c,), jnp.float32)
        var = 1.0 + 0.1 * jax.random.uniform(nk(), (c,), jnp.float32)
        scale = gamma / jnp.sqrt(var + BN_EPS)
        return scale, beta - mean * scale

    def pad_mat(w, kp, np_):
        k0, n0 = w.shape
        return jnp.pad(w, ((0, kp - k0), (0, np_ - n0)))

    def pad_vec(v, np_):
        return jnp.pad(v, (0, np_ - v.shape[0]))

    def fused_conv(cin, cout):
        """1x1 conv (cin->cout) with BN scale folded in; channel-padded."""
        cin_p, cout_p = _round_up(cin, LANE), _round_up(cout, LANE)
        w = conv_w((cin, cout), cin)
        scale, bias = bn(cout)
        wf = pad_mat(w * scale[None, :], cin_p, cout_p).astype(jnp.bfloat16)
        return wf, pad_vec(bias, cout_p)

    def dw_conv(c, k):
        cp = _round_up(c, LANE)
        w = conv_w((k * k, c), k * k)
        scale, bias = bn(c)
        wf = jnp.pad(w * scale[None, :], ((0, 0), (0, cp - c)))  # f32
        return wf, pad_vec(bias, cp)

    def se_params(c, r=4):
        cp = _round_up(c, LANE)
        hd = c * r
        hdp = _round_up(hd, LANE)
        w1 = conv_w((c, hd), c)
        b1 = 0.1 * jax.random.normal(nk(), (hd,), jnp.float32)
        w2 = conv_w((hd, c), hd)
        b2 = 0.1 * jax.random.normal(nk(), (c,), jnp.float32)
        return dict(w1=pad_mat(w1, cp, hdp).astype(jnp.bfloat16),
                    b1=pad_vec(b1, hdp),
                    w2=pad_mat(w2, hdp, cp).astype(jnp.bfloat16),
                    b2=pad_vec(b2, cp))

    def sepconv_params(cin, cout, k):
        dw, db = dw_conv(cin, k)
        pw, pb = fused_conv(cin, cout)
        return dict(dw_w=dw, dw_b=db, se=se_params(cin), proj_w=pw, proj_b=pb)

    def mbconv_params(cin, cout, k):
        ce = cin * 6
        ew, eb = fused_conv(cin, ce)
        dw, db = dw_conv(ce, k)
        pw, pb = fused_conv(ce, cout)
        return dict(expand_w=ew, expand_b=eb, dw_w=dw, dw_b=db,
                    se=se_params(ce), proj_w=pw, proj_b=pb)

    params = {}
    c0p = _round_up(channels[0], LANE)
    w1 = conv_w((27, channels[0]), 27)
    s1, b1 = bn(channels[0])
    params["stage1"] = dict(
        w=jnp.pad(w1 * s1[None, :], ((0, 0), (0, c0p - channels[0]))
                  ).astype(jnp.bfloat16),
        b=pad_vec(b1, c0p))

    stages = []
    in_c = channels[0]
    for si in range(7):
        out_c = channels[si + 1]
        k, stride, rep = ksizes[si], strides_cfg[si], repeats[si]
        blocks = []
        cin = in_c
        for bs in [stride] + [1] * (rep - 1):
            bp = sepconv_params(cin, out_c, k) if si == 0 else mbconv_params(cin, out_c, k)
            blocks.append(dict(params=bp, stride=bs, k=k,
                               shortcut=(bs == 1 and cin == out_c),
                               kind="sep" if si == 0 else "mb"))
            cin = out_c
        stages.append(blocks)
        in_c = out_c
    params["stages"] = stages

    w9, b9 = fused_conv(channels[7], channels[8])
    params["stage9"] = dict(w=w9, b=b9)

    ncp = _round_up(num_classes, LANE)
    wl = conv_w((channels[8], num_classes), channels[8])
    bl = 0.1 * jax.random.normal(nk(), (num_classes,), jnp.float32)
    params["linear"] = dict(w=pad_mat(wl, channels[8], ncp).astype(jnp.bfloat16),
                            b=pad_vec(bl, ncp), n=num_classes)
    return params


if __name__ == "__main__":
    key = jax.random.PRNGKey(0)
    kp, kx = jax.random.split(key)
    params = init_params(kp)

    # PyTorch-style NCHW input: batch=2, 3 channels (stage1 requires 3), 16x16.
    x_nchw = jax.random.normal(kx, (2, 3, 16, 16), jnp.float32)
    x_nhwc = jnp.transpose(x_nchw, (0, 2, 3, 1))

    logits = efficientnet_forward(x_nhwc, params)
    jax.block_until_ready(logits)
    assert logits.shape == (2, 10)
    print("KERNEL_OK")
</pallas_src>

<mosaic_0001>
module attributes {stable_mosaic.version = 11 : i64} {
  func.func @_fused_matmul_kernel(%arg0: i32, %arg1: i32, %arg2: i32, %arg3: i32, %arg4: memref<1x128x128xbf16, #tpu.memory_space<vmem>>, %arg5: memref<128x128xbf16, #tpu.memory_space<vmem>>, %arg6: memref<1x128xf32, #tpu.memory_space<vmem>>, %arg7: memref<1x128x128xbf16, #tpu.memory_space<vmem>>, %arg8: memref<128x128xf32, #tpu.memory_space<vmem>>) attributes {dimension_semantics = [#tpu.dimension_semantics<parallel>, #tpu.dimension_semantics<parallel>, #tpu.dimension_semantics<parallel>, #tpu.dimension_semantics<arbitrary>], iteration_bounds = array<i64: 1, 1, 1, 1>, scalar_prefetch = 0 : i64, scratch_operands = 1 : i64, tpu.core_type = #tpu.core_type<tc>, window_params = [{transform_indices = @transform_0, window_bounds = array<i64: 1, 128, 128>}, {transform_indices = @transform_1, window_bounds = array<i64: 128, 128>}, {transform_indices = @transform_2, window_bounds = array<i64: 1, 128>}, {transform_indices = @transform_3, window_bounds = array<i64: 1, 128, 128>}]} {
    %c0_i32 = arith.constant 0 : i32
    %0 = arith.cmpi eq, %arg3, %c0_i32 : i32
    %1 = arith.extui %0 : i1 to i32
    %c0_i32_0 = arith.constant 0 : i32
    %2 = arith.cmpi ne, %1, %c0_i32_0 : i32
    scf.if %2 {
      %cst_11 = arith.constant 0.000000e+00 : f32
      %13 = vector.broadcast %cst_11 : f32 to vector<128x128xf32>
      %c0_12 = arith.constant 0 : index
      %c0_13 = arith.constant 0 : index
      %14 = vector.load %arg8[%c0_12, %c0_13] : memref<128x128xf32, #tpu.memory_space<vmem>>, vector<128x128xf32>
      tpu.vector_store %arg8[%c0_12, %c0_13], %13 {strides = array<i32>} : memref<128x128xf32, #tpu.memory_space<vmem>>, vector<128x128xf32>,
    } else {
    }
    %c0 = arith.constant 0 : index
    %c0_1 = arith.constant 0 : index
    %c0_2 = arith.constant 0 : index
    %3 = vector.load %arg4[%c0, %c0_1, %c0_2] : memref<1x128x128xbf16, #tpu.memory_space<vmem>>, vector<1x128x128xbf16>
    %4 = vector.shape_cast %3 : vector<1x128x128xbf16> to vector<128x128xbf16>
    %c0_3 = arith.constant 0 : index
    %c0_4 = arith.constant 0 : index
    %5 = vector.load %arg8[%c0_3, %c0_4] : memref<128x128xf32, #tpu.memory_space<vmem>>, vector<128x128xf32>
    %c0_5 = arith.constant 0 : index
    %c0_6 = arith.constant 0 : index
    %6 = vector.load %arg5[%c0_5, %c0_6] : memref<128x128xbf16, #tpu.memory_space<vmem>>, vector<128x128xbf16>
    %cst = arith.constant dense<0.000000e+00> : vector<128x128xf32>
    %7 = tpu.matmul %4, %6, %cst {dimension_numbers = #tpu.dot_dimension_numbers<[1], [0], [0], [1], [0, 0, 1, 1], [], []>} : vector<128x128xbf16>, vector<128x128xbf16>, vector<128x128xf32> -> vector<128x128xf32>
    %8 = arith.addf %5, %7 : vector<128x128xf32>
    %c0_7 = arith.constant 0 : index
    %c0_8 = arith.constant 0 : index
    %9 = vector.load %arg8[%c0_7, %c0_8] : memref<128x128xf32, #tpu.memory_space<vmem>>, vector<128x128xf32>
    tpu.vector_store %arg8[%c0_7, %c0_8], %8 {strides = array<i32>} : memref<128x128xf32, #tpu.memory_space<vmem>>, vector<128x128xf32>,
    %c0_i32_9 = arith.constant 0 : i32
    %10 = arith.cmpi eq, %arg3, %c0_i32_9 : i32
    %11 = arith.extui %10 : i1 to i32
    %c0_i32_10 = arith.constant 0 : i32
    %12 = arith.cmpi ne, %11, %c0_i32_10 : i32
    scf.if %12 {
      %c0_11 = arith.constant 0 : index
      %c0_12 = arith.constant 0 : index
      %13 = vector.load %arg8[%c0_11, %c0_12] : memref<128x128xf32, #tpu.memory_space<vmem>>, vector<128x128xf32>
      %c0_13 = arith.constant 0 : index
      %c0_14 = arith.constant 0 : index
      %14 = vector.load %arg6[%c0_13, %c0_14] : memref<1x128xf32, #tpu.memory_space<vmem>>, vector<1x128xf32>
      %15 = vector.broadcast %14 : vector<1x128xf32> to vector<128x128xf32>
      %16 = arith.addf %13, %15 : vector<128x128xf32>
      %17 = arith.truncf %16 : vector<128x128xf32> to vector<128x128xbf16>
      %c0_15 = arith.constant 0 : index
      %c0_16 = arith.constant 0 : index
      %c0_17 = arith.constant 0 : index
      %18 = vector.load %arg7[%c0_15, %c0_16, %c0_17] : memref<1x128x128xbf16, #tpu.memory_space<vmem>>, vector<1x128x128xbf16>
      %19 = vector.shape_cast %18 : vector<1x128x128xbf16> to vector<128x128xbf16>
      %20 = vector.shape_cast %17 : vector<128x128xbf16> to vector<1x128x128xbf16>
      tpu.vector_store %arg7[%c0_15, %c0_16, %c0_17], %20 {strides = array<i32>} : memref<1x128x128xbf16, #tpu.memory_space<vmem>>, vector<1x128x128xbf16>,
    } else {
    }
    return
  }
  func.func @transform_0(%arg0: i32, %arg1: i32, %arg2: i32, %arg3: i32) -> (i32, i32, i32) {
    %c0_i32 = arith.constant 0 : i32
    return %arg0, %arg1, %arg3 : i32, i32, i32
  }
  func.func @transform_1(%arg0: i32, %arg1: i32, %arg2: i32, %arg3: i32) -> (i32, i32) {
    %c0_i32 = arith.constant 0 : i32
    return %arg3, %arg2 : i32, i32
  }
  func.func @transform_2(%arg0: i32, %arg1: i32, %arg2: i32, %arg3: i32) -> (i32, i32) {
    %c0_i32 = arith.constant 0 : i32
    %c0_i32_0 = arith.constant 0 : i32
    return %c0_i32, %arg2 : i32, i32
  }
  func.func @transform_3(%arg0: i32, %arg1: i32, %arg2: i32, %arg3: i32) -> (i32, i32, i32) {
    %c0_i32 = arith.constant 0 : i32
    return %arg0, %arg1, %arg2 : i32, i32, i32
  }
}

</mosaic_0001>

<llo_original>
// kernel: tpu_custom_call.1
$region0: #{tpu_custom_call.1}
  #allocation0 [shape = 'u32[]', space=smem, size = 0x4, offset = 0x4, fixed_abs, tag = 'smem constant byte address 0x4 - core index']
  #allocation1 [shape = 'u32[144,128]{1,0:T(1,128)}', space=vmem, size = 0x12000, scoped, tag = 'internal scratch']
  #allocation2 [shape = 'f32[128,128]{1,0:T(8,128)}', space=vmem, size = 0x10000, scoped, tag = 'scratch operand']
  %s0 = inlined_call_operand.hbm [shape: bf16[1,128,128], index: 0, kind: input, shape index: {}]
  %s1 = inlined_call_operand.hbm [shape: bf16[128,128], index: 1, kind: input, shape index: {}]
  %s2 = inlined_call_operand.vmem [shape: f32[1,128], index: 2, kind: input, shape index: {}]
  %s3 = inlined_call_operand.hbm [shape: bf16[1,128,128], index: 3, kind: output, shape index: {}]
  %s4 = sld [smem:[#allocation0]]
  $region38: #{tpu_custom_call.1} parent=0
    _
  %s6 = ssub.s32 1, %s4
  %s7 = scalar_select 0, %s6, %s4
  $region1: #{tpu_custom_call.1} parent=0
    #allocation3 [shape = 'u8[32768]{0}', space=vmem, size = 0x8000, scoped, tag = 'input window, operand 0, single buffered']
    #allocation4 [shape = 's32[1]{0}', space=sflag, size = 0x4, scoped, tag = 'scoped memory for tpu_custom_call.1']
    #allocation5 [shape = 's32[1]{0}', space=sflag, size = 0x4, scoped, tag = 'scoped memory for tpu_custom_call.1']
    #allocation6 [shape = 'u8[32768]{0}', space=vmem, size = 0x8000, scoped, tag = 'input window, operand 1, single buffered']
    #allocation7 [shape = 's32[1]{0}', space=sflag, size = 0x4, scoped, tag = 'scoped memory for tpu_custom_call.1']
    #allocation8 [shape = 'u8[32768]{0}', space=vmem, size = 0x8000, scoped, tag = 'output window, operand 0, single buffered']
    %8 = vsyncpa [#allocation4], 0
    %9 = vsyncpa [#allocation7], 0
    %10 = vsyncpa [#allocation5], 0
    // Predicated region
    $region2: #{tpu_custom_call.1} parent=1 // pred_check
      _
    $region3: #{tpu_custom_call.1} parent=1 // pred_check_branch
      %12 = sbr.rel (0) target = $region5
    $region4: #{tpu_custom_call.1} parent=1 // pred_region
      %s14 = ssub.s32 1024, 1024
      %15 = vsyncadd [#allocation4], %s14
      %s16 = sshll.u32 [#allocation3], 4
      %s17 = int_to_ptr.vmem [resolvable:$true] %s16
      %22 = dma.hbm_to_vmem [thread:$0]  %s0, 1024, %s17, [#allocation4], 64, 64, 4
    $region5: #{tpu_custom_call.1} parent=1 // pred_fallthru
      _
    // Predicated region
    $region6: #{tpu_custom_call.1} parent=1 // pred_check
      _
    $region7: #{tpu_custom_call.1} parent=1 // pred_check_branch
      %24 = sbr.rel (0) target = $region9
    $region8: #{tpu_custom_call.1} parent=1 // pred_region
      %s26 = ssub.s32 1024, 1024
      %27 = vsyncadd [#allocation7], %s26
      %s28 = sshll.u32 [#allocation6], 4
      %s29 = int_to_ptr.vmem [resolvable:$true] %s28
      %34 = dma.hbm_to_vmem [thread:$0]  %s1, 1024, %s29, [#allocation7], 64, 64, 4
    $region9: #{tpu_custom_call.1} parent=1 // pred_fallthru
      _
    // Predicated region
    $region10: #{tpu_custom_call.1} parent=1 // pred_check
      _
    $region11: #{tpu_custom_call.1} parent=1 // pred_check_branch
      %36 = sbr.rel (0) target = $region13
    $region12: #{tpu_custom_call.1} parent=1 // pred_region
      _
    $region13: #{tpu_custom_call.1} parent=1 // pred_fallthru
      _
    // Predicated region
    $region14: #{tpu_custom_call.1} parent=1 // pred_check
      _
    $region15: #{tpu_custom_call.1} parent=1 // pred_check_branch
      %38 = sbr.rel (0) target = $region17
    $region16: #{tpu_custom_call.1} parent=1 // pred_region
      %39 = dma.done [#allocation4], 1024
    $region17: #{tpu_custom_call.1} parent=1 // pred_fallthru
      _
    // Predicated region
    $region18: #{tpu_custom_call.1} parent=1 // pred_check
      _
    $region19: #{tpu_custom_call.1} parent=1 // pred_check_branch
      %41 = sbr.rel (0) target = $region21
    $region20: #{tpu_custom_call.1} parent=1 // pred_region
      %42 = dma.done [#allocation7], 1024
    $region21: #{tpu_custom_call.1} parent=1 // pred_fallthru
      _
    %p44 = scmp.eq.s32.totalorder 0, 0
    // Predicated region
    $region22: #{tpu_custom_call.1} parent=1 // pred_check
      %p45 = pneg %p44
    $region23: #{tpu_custom_call.1} parent=1 // pred_check_branch
      %47 = sbr.rel (%p45) target = $region25
    $region24: #{tpu_custom_call.1} parent=1 // pred_region
      %48 = vst [vmem:[#allocation2] sm:$0xff] 0.0
      %49 = vst [vmem:[#allocation2 + $0x8] sm:$0xff] 0.0
      %50 = vst [vmem:[#allocation2 + $0x10] sm:$0xff] 0.0
      %51 = vst [vmem:[#allocation2 + $0x18] sm:$0xff] 0.0
      %52 = vst [vmem:[#allocation2 + $0x20] sm:$0xff] 0.0
      %53 = vst [vmem:[#allocation2 + $0x28] sm:$0xff] 0.0
      %54 = vst [vmem:[#allocation2 + $0x30] sm:$0xff] 0.0
      %55 = vst [vmem:[#allocation2 + $0x38] sm:$0xff] 0.0
      %56 = vst [vmem:[#allocation2 + $0x40] sm:$0xff] 0.0
      %57 = vst [vmem:[#allocation2 + $0x48] sm:$0xff] 0.0
      %58 = vst [vmem:[#allocation2 + $0x50] sm:$0xff] 0.0
      %59 = vst [vmem:[#allocation2 + $0x58] sm:$0xff] 0.0
      %60 = vst [vmem:[#allocation2 + $0x60] sm:$0xff] 0.0
      %61 = vst [vmem:[#allocation2 + $0x68] sm:$0xff] 0.0
      %62 = vst [vmem:[#allocation2 + $0x70] sm:$0xff] 0.0
      %63 = vst [vmem:[#allocation2 + $0x78] sm:$0xff] 0.0
    $region25: #{tpu_custom_call.1} parent=1 // pred_fallthru
      _
    %v64 = vld [vmem:[#allocation3] sm:$0xf]
    %v65 = vld [vmem:[#allocation3 + $0x4] sm:$0xf]
    %v66 = vld [vmem:[#allocation3 + $0x8] sm:$0xf]
    %v67 = vld [vmem:[#allocation3 + $0xc] sm:$0xf]
    %v68 = vld [vmem:[#allocation3 + $0x10] sm:$0xf]
    %v69 = vld [vmem:[#allocation3 + $0x14] sm:$0xf]
    %v70 = vld [vmem:[#allocation3 + $0x18] sm:$0xf]
    %v71 = vld [vmem:[#allocation3 + $0x1c] sm:$0xf]
    %v72 = vld [vmem:[#allocation3 + $0x20] sm:$0xf]
    %v73 = vld [vmem:[#allocation3 + $0x24] sm:$0xf]
    %v74 = vld [vmem:[#allocation3 + $0x28] sm:$0xf]
    %v75 = vld [vmem:[#allocation3 + $0x2c] sm:$0xf]
    %v76 = vld [vmem:[#allocation3 + $0x30] sm:$0xf]
    %v77 = vld [vmem:[#allocation3 + $0x34] sm:$0xf]
    %v78 = vld [vmem:[#allocation3 + $0x38] sm:$0xf]
    %v79 = vld [vmem:[#allocation3 + $0x3c] sm:$0xf]
    %v80 = vld [vmem:[#allocation2] sm:$0xff]
    %v81 = vld [vmem:[#allocation2 + $0x8] sm:$0xff]
    %v82 = vld [vmem:[#allocation2 + $0x10] sm:$0xff]
    %v83 = vld [vmem:[#allocation2 + $0x18] sm:$0xff]
    %v84 = vld [vmem:[#allocation2 + $0x20] sm:$0xff]
    %v85 = vld [vmem:[#allocation2 + $0x28] sm:$0xff]
    %v86 = vld [vmem:[#allocation2 + $0x30] sm:$0xff]
    %v87 = vld [vmem:[#allocation2 + $0x38] sm:$0xff]
    %v88 = vld [vmem:[#allocation2 + $0x40] sm:$0xff]
    %v89 = vld [vmem:[#allocation2 + $0x48] sm:$0xff]
    %v90 = vld [vmem:[#allocation2 + $0x50] sm:$0xff]
    %v91 = vld [vmem:[#allocation2 + $0x58] sm:$0xff]
    %v92 = vld [vmem:[#allocation2 + $0x60] sm:$0xff]
    %v93 = vld [vmem:[#allocation2 + $0x68] sm:$0xff]
    %v94 = vld [vmem:[#allocation2 + $0x70] sm:$0xff]
    %v95 = vld [vmem:[#allocation2 + $0x78] sm:$0xff]
    %v96 = vld [vmem:[#allocation6] sm:$0xf]
    %v97 = vld [vmem:[#allocation6 + $0x4] sm:$0xf]
    %v98 = vld [vmem:[#allocation6 + $0x8] sm:$0xf]
    %v99 = vld [vmem:[#allocation6 + $0xc] sm:$0xf]
    %v100 = vld [vmem:[#allocation6 + $0x10] sm:$0xf]
    %v101 = vld [vmem:[#allocation6 + $0x14] sm:$0xf]
    %v102 = vld [vmem:[#allocation6 + $0x18] sm:$0xf]
    %v103 = vld [vmem:[#allocation6 + $0x1c] sm:$0xf]
    %v104 = vld [vmem:[#allocation6 + $0x20] sm:$0xf]
    %v105 = vld [vmem:[#allocation6 + $0x24] sm:$0xf]
    %v106 = vld [vmem:[#allocation6 + $0x28] sm:$0xf]
    %v107 = vld [vmem:[#allocation6 + $0x2c] sm:$0xf]
    %v108 = vld [vmem:[#allocation6 + $0x30] sm:$0xf]
    %v109 = vld [vmem:[#allocation6 + $0x34] sm:$0xf]
    %v110 = vld [vmem:[#allocation6 + $0x38] sm:$0xf]
    %v111 = vld [vmem:[#allocation6 + $0x3c] sm:$0xf]
    %v128 = vunpack.c.l.b16 %v64
    %v129 = vunpack.c.l.b16 %v65
    %v130 = vunpack.c.l.b16 %v66
    %v131 = vunpack.c.l.b16 %v67
    %v132 = vunpack.c.l.b16 %v68
    %v133 = vunpack.c.l.b16 %v69
    %v134 = vunpack.c.l.b16 %v70
    %v135 = vunpack.c.l.b16 %v71
    %v136 = vunpack.c.l.b16 %v72
    %v137 = vunpack.c.l.b16 %v73
    %v138 = vunpack.c.l.b16 %v74
    %v139 = vunpack.c.l.b16 %v75
    %v140 = vunpack.c.l.b16 %v76
    %v141 = vunpack.c.l.b16 %v77
    %v142 = vunpack.c.l.b16 %v78
    %v143 = vunpack.c.l.b16 %v79
    %v144 = vpack.c.b16 %v129, %v128
    %v145 = vpack.c.b16 %v131, %v130
    %v146 = vpack.c.b16 %v133, %v132
    %v147 = vpack.c.b16 %v135, %v134
    %v148 = vpack.c.b16 %v137, %v136
    %v149 = vpack.c.b16 %v139, %v138
    %v150 = vpack.c.b16 %v141, %v140
    %v151 = vpack.c.b16 %v143, %v142
    %v176 = vunpack.c.l.b16 %v96
    %v177 = vunpack.c.l.b16 %v97
    %v178 = vunpack.c.l.b16 %v98
    %v179 = vunpack.c.l.b16 %v99
    %v180 = vunpack.c.l.b16 %v100
    %v181 = vunpack.c.l.b16 %v101
    %v182 = vunpack.c.l.b16 %v102
    %v183 = vunpack.c.l.b16 %v103
    %v184 = vunpack.c.l.b16 %v104
    %v185 = vunpack.c.l.b16 %v105
    %v186 = vunpack.c.l.b16 %v106
    %v187 = vunpack.c.l.b16 %v107
    %v188 = vunpack.c.l.b16 %v108
    %v189 = vunpack.c.l.b16 %v109
    %v190 = vunpack.c.l.b16 %v110
    %v191 = vunpack.c.l.b16 %v111
    %v192 = vpack.c.b16 %v177, %v176
    %v193 = vpack.c.b16 %v179, %v178
    %v194 = vpack.c.b16 %v181, %v180
    %v195 = vpack.c.b16 %v183, %v182
    %v196 = vpack.c.b16 %v185, %v184
    %v197 = vpack.c.b16 %v187, %v186
    %v198 = vpack.c.b16 %v189, %v188
    %v199 = vpack.c.b16 %v191, %v190
    %208 = vmatprep.subr.bf16.mxu0 0
    %209 = vmatpush1.bf16.msra.mxu0 %v192
    %210 = vmatprep.subr.bf16.mxu0 0
    %211 = vmatpush1.bf16.msra.mxu0 %v193
    %212 = vmatprep.subr.bf16.mxu0 0
    %213 = vmatpush1.bf16.msra.mxu0 %v194
    %214 = vmatprep.subr.bf16.mxu0 0
    %215 = vmatpush1.bf16.msra.mxu0 %v195
    %216 = vmatprep.subr.bf16.mxu0 0
    %217 = vmatpush1.bf16.msra.mxu0 %v196
    %218 = vmatprep.subr.bf16.mxu0 0
    %219 = vmatpush1.bf16.msra.mxu0 %v197
    %220 = vmatprep.subr.bf16.mxu0 0
    %221 = vmatpush1.bf16.msra.mxu0 %v198
    %222 = vmatprep.subr.bf16.mxu0 0
    %223 = vmatpush1.bf16.msra.mxu0 %v199
    %224 = vmatprep.subr.bf16.mxu0 0
    %225 = vmatpush1.bf16.msra.mxu0 0
    %226 = vmatprep.subr.bf16.mxu0 0
    %227 = vmatpush1.bf16.msra.mxu0 0
    %228 = vmatprep.subr.bf16.mxu0 0
    %229 = vmatpush1.bf16.msra.mxu0 0
    %230 = vmatprep.subr.bf16.mxu0 0
    %231 = vmatpush1.bf16.msra.mxu0 0
    %232 = vmatprep.subr.bf16.mxu0 0
    %233 = vmatpush1.bf16.msra.mxu0 0
    %234 = vmatprep.subr.bf16.mxu0 0
    %235 = vmatpush1.bf16.msra.mxu0 0
    %236 = vmatprep.subr.bf16.mxu0 0
    %237 = vmatpush1.bf16.msra.mxu0 0
    %238 = vmatprep.subr.bf16.mxu0 0
    %239 = vmatpush1.bf16.msra.mxu0 0
    %240 = vmatprep.mubr.bf16.mxu0 0
    %241 = vmatmul.mubr.bf16.gmra.mrb[0].mxu0 %v144
    %v242 = vpop.f32.mrb[0].mxu0
    %v243 = vadd.f32 0.0, %v242
    %v244 = vpop.f32.mrb[0].mxu0
    %v245 = vpop.f32.mrb[0].mxu0
    %v246 = vadd.f32 0.0, %v245
    %v247 = vpop.f32.mrb[0].mxu0
    %248 = vmatprep.mubr.bf16.mxu0 0
    %249 = vmatmul.mubr.bf16.gmra.mrb[0].mxu0 %v145
    %v250 = vpop.f32.mrb[0].mxu0
    %v251 = vadd.f32 0.0, %v250
    %v252 = vpop.f32.mrb[0].mxu0
    %v253 = vpop.f32.mrb[0].mxu0
    %v254 = vadd.f32 0.0, %v253
    %v255 = vpop.f32.mrb[0].mxu0
    %256 = vmatprep.mubr.bf16.mxu0 0
    %257 = vmatmul.mubr.bf16.gmra.mrb[0].mxu0 %v146
    %v258 = vpop.f32.mrb[0].mxu0
    %v259 = vadd.f32 0.0, %v258
    %v260 = vpop.f32.mrb[0].mxu0
    %v261 = vpop.f32.mrb[0].mxu0
    %v262 = vadd.f32 0.0, %v261
    %v263 = vpop.f32.mrb[0].mxu0
    %264 = vmatprep.mubr.bf16.mxu0 0
    %265 = vmatmul.mubr.bf16.gmra.mrb[0].mxu0 %v147
    %v266 = vpop.f32.mrb[0].mxu0
    %v267 = vadd.f32 0.0, %v266
    %v268 = vpop.f32.mrb[0].mxu0
    %v269 = vpop.f32.mrb[0].mxu0
    %v270 = vadd.f32 0.0, %v269
    %v271 = vpop.f32.mrb[0].mxu0
    %272 = vmatprep.mubr.bf16.mxu0 0
    %273 = vmatmul.mubr.bf16.gmra.mrb[0].mxu0 %v148
    %v274 = vpop.f32.mrb[0].mxu0
    %v275 = vadd.f32 0.0, %v274
    %v276 = vpop.f32.mrb[0].mxu0
    %v277 = vpop.f32.mrb[0].mxu0
    %v278 = vadd.f32 0.0, %v277
    %v279 = vpop.f32.mrb[0].mxu0
    %280 = vmatprep.mubr.bf16.mxu0 0
    %281 = vmatmul.mubr.bf16.gmra.mrb[0].mxu0 %v149
    %v282 = vpop.f32.mrb[0].mxu0
    %v283 = vadd.f32 0.0, %v282
    %v284 = vpop.f32.mrb[0].mxu0
    %v285 = vpop.f32.mrb[0].mxu0
    %v286 = vadd.f32 0.0, %v285
    %v287 = vpop.f32.mrb[0].mxu0
    %288 = vmatprep.mubr.bf16.mxu0 0
    %289 = vmatmul.mubr.bf16.gmra.mrb[0].mxu0 %v150
    %v290 = vpop.f32.mrb[0].mxu0
    %v291 = vadd.f32 0.0, %v290
    %v292 = vpop.f32.mrb[0].mxu0
    %v293 = vpop.f32.mrb[0].mxu0
    %v294 = vadd.f32 0.0, %v293
    %v295 = vpop.f32.mrb[0].mxu0
    %296 = vmatprep.mubr.bf16.mxu0 0
    %297 = vmatmul.mubr.bf16.gmra.mrb[0].mxu0 %v151
    %v298 = vpop.f32.mrb[0].mxu0
    %v299 = vadd.f32 0.0, %v298
    %v300 = vpop.f32.mrb[0].mxu0
    %v301 = vpop.f32.mrb[0].mxu0
    %v302 = vadd.f32 0.0, %v301
    %v303 = vpop.f32.mrb[0].mxu0
    %304 = vdwg.mxu0
    %v305 = vadd.f32 %v80, %v243
    %v306 = vadd.f32 %v81, %v246
    %v307 = vadd.f32 %v82, %v251
    %v308 = vadd.f32 %v83, %v254
    %v309 = vadd.f32 %v84, %v259
    %v310 = vadd.f32 %v85, %v262
    %v311 = vadd.f32 %v86, %v267
    %v312 = vadd.f32 %v87, %v270
    %v313 = vadd.f32 %v88, %v275
    %v314 = vadd.f32 %v89, %v278
    %v315 = vadd.f32 %v90, %v283
    %v316 = vadd.f32 %v91, %v286
    %v317 = vadd.f32 %v92, %v291
    %v318 = vadd.f32 %v93, %v294
    %v319 = vadd.f32 %v94, %v299
    %v320 = vadd.f32 %v95, %v302
    %321 = vst [vmem:[#allocation2] sm:$0xff] %v305
    %322 = vst [vmem:[#allocation2 + $0x8] sm:$0xff] %v306
    %323 = vst [vmem:[#allocation2 + $0x10] sm:$0xff] %v307
    %324 = vst [vmem:[#allocation2 + $0x18] sm:$0xff] %v308
    %325 = vst [vmem:[#allocation2 + $0x20] sm:$0xff] %v309
    %326 = vst [vmem:[#allocation2 + $0x28] sm:$0xff] %v310
    %327 = vst [vmem:[#allocation2 + $0x30] sm:$0xff] %v311
    %328 = vst [vmem:[#allocation2 + $0x38] sm:$0xff] %v312
    %329 = vst [vmem:[#allocation2 + $0x40] sm:$0xff] %v313
    %330 = vst [vmem:[#allocation2 + $0x48] sm:$0xff] %v314
    %331 = vst [vmem:[#allocation2 + $0x50] sm:$0xff] %v315
    %332 = vst [vmem:[#allocation2 + $0x58] sm:$0xff] %v316
    %333 = vst [vmem:[#allocation2 + $0x60] sm:$0xff] %v317
    %334 = vst [vmem:[#allocation2 + $0x68] sm:$0xff] %v318
    %335 = vst [vmem:[#allocation2 + $0x70] sm:$0xff] %v319
    %336 = vst [vmem:[#allocation2 + $0x78] sm:$0xff] %v320
    // Predicated region
    $region26: #{tpu_custom_call.1} parent=1 // pred_check
      %p337 = pneg %p44
    $region27: #{tpu_custom_call.1} parent=1 // pred_check_branch
      %339 = sbr.rel (%p337) target = $region29
    $region28: #{tpu_custom_call.1} parent=1 // pred_region
      %v340 = vld [vmem:[#allocation2] sm:$0xff]
      %v341 = vld [vmem:[#allocation2 + $0x8] sm:$0xff]
      %v342 = vld [vmem:[#allocation2 + $0x10] sm:$0xff]
      %v343 = vld [vmem:[#allocation2 + $0x18] sm:$0xff]
      %v344 = vld [vmem:[#allocation2 + $0x20] sm:$0xff]
      %v345 = vld [vmem:[#allocation2 + $0x28] sm:$0xff]
      %v346 = vld [vmem:[#allocation2 + $0x30] sm:$0xff]
      %v347 = vld [vmem:[#allocation2 + $0x38] sm:$0xff]
      %v348 = vld [vmem:[#allocation2 + $0x40] sm:$0xff]
      %v349 = vld [vmem:[#allocation2 + $0x48] sm:$0xff]
      %v350 = vld [vmem:[#allocation2 + $0x50] sm:$0xff]
      %v351 = vld [vmem:[#allocation2 + $0x58] sm:$0xff]
      %v352 = vld [vmem:[#allocation2 + $0x60] sm:$0xff]
      %v353 = vld [vmem:[#allocation2 + $0x68] sm:$0xff]
      %v354 = vld [vmem:[#allocation2 + $0x70] sm:$0xff]
      %v355 = vld [vmem:[#allocation2 + $0x78] sm:$0xff]
      %v356 = vld [vmem:[%s2] sm:$0x1]
      %v358 = vlaneseq
      %v359 = vshrl.u32 %v358, 7
      %v360 = vsub.s32 0, %v359
      %v361 = vrot.slane %v356, %v360
      %v363 = vadd.f32 %v340, %v361
      %v364 = vadd.f32 %v341, %v361
      %v365 = vadd.f32 %v342, %v361
      %v366 = vadd.f32 %v343, %v361
      %v367 = vadd.f32 %v344, %v361
      %v368 = vadd.f32 %v345, %v361
      %v369 = vadd.f32 %v346, %v361
      %v370 = vadd.f32 %v347, %v361
      %v371 = vadd.f32 %v348, %v361
      %v372 = vadd.f32 %v349, %v361
      %v373 = vadd.f32 %v350, %v361
      %v374 = vadd.f32 %v351, %v361
      %v375 = vadd.f32 %v352, %v361
      %v376 = vadd.f32 %v353, %v361
      %v377 = vadd.f32 %v354, %v361
      %v378 = vadd.f32 %v355, %v361
      %v379 = vpack.c.bf16 %v364, %v363
      %v380 = vpack.c.bf16 %v366, %v365
      %v381 = vpack.c.bf16 %v368, %v367
      %v382 = vpack.c.bf16 %v370, %v369
      %v383 = vpack.c.bf16 %v372, %v371
      %v384 = vpack.c.bf16 %v374, %v373
      %v385 = vpack.c.bf16 %v376, %v375
      %v386 = vpack.c.bf16 %v378, %v377
      %v395 = vunpack.c.l.b16 %v379
      %v396 = vunpack.c.h.b16 %v379
      %v397 = vunpack.c.l.b16 %v380
      %v398 = vunpack.c.h.b16 %v380
      %v399 = vunpack.c.l.b16 %v381
      %v400 = vunpack.c.h.b16 %v381
      %v401 = vunpack.c.l.b16 %v382
      %v402 = vunpack.c.h.b16 %v382
      %v403 = vunpack.c.l.b16 %v383
      %v404 = vunpack.c.h.b16 %v383
      %v405 = vunpack.c.l.b16 %v384
      %v406 = vunpack.c.h.b16 %v384
      %v407 = vunpack.c.l.b16 %v385
      %v408 = vunpack.c.h.b16 %v385
      %v409 = vunpack.c.l.b16 %v386
      %v410 = vunpack.c.h.b16 %v386
      %v411 = vpack.c.b16 %v395, %v395
      %v412 = vpack.c.b16 %v396, %v396
      %v413 = vpack.c.b16 %v397, %v397
      %v414 = vpack.c.b16 %v398, %v398
      %v415 = vpack.c.b16 %v399, %v399
      %v416 = vpack.c.b16 %v400, %v400
      %v417 = vpack.c.b16 %v401, %v401
      %v418 = vpack.c.b16 %v402, %v402
      %v419 = vpack.c.b16 %v403, %v403
      %v420 = vpack.c.b16 %v404, %v404
      %v421 = vpack.c.b16 %v405, %v405
      %v422 = vpack.c.b16 %v406, %v406
      %v423 = vpack.c.b16 %v407, %v407
      %v424 = vpack.c.b16 %v408, %v408
      %v425 = vpack.c.b16 %v409, %v409
      %v426 = vpack.c.b16 %v410, %v410
      %443 = vst [vmem:[#allocation8] sm:$0xf] %v411
      %444 = vst [vmem:[#allocation8 + $0x4] sm:$0xf] %v412
      %445 = vst [vmem:[#allocation8 + $0x8] sm:$0xf] %v413
      %446 = vst [vmem:[#allocation8 + $0xc] sm:$0xf] %v414
      %447 = vst [vmem:[#allocation8 + $0x10] sm:$0xf] %v415
      %448 = vst [vmem:[#allocation8 + $0x14] sm:$0xf] %v416
      %449 = vst [vmem:[#allocation8 + $0x18] sm:$0xf] %v417
      %450 = vst [vmem:[#allocation8 + $0x1c] sm:$0xf] %v418
      %451 = vst [vmem:[#allocation8 + $0x20] sm:$0xf] %v419
      %452 = vst [vmem:[#allocation8 + $0x24] sm:$0xf] %v420
      %453 = vst [vmem:[#allocation8 + $0x28] sm:$0xf] %v421
      %454 = vst [vmem:[#allocation8 + $0x2c] sm:$0xf] %v422
      %455 = vst [vmem:[#allocation8 + $0x30] sm:$0xf] %v423
      %456 = vst [vmem:[#allocation8 + $0x34] sm:$0xf] %v424
      %457 = vst [vmem:[#allocation8 + $0x38] sm:$0xf] %v425
      %458 = vst [vmem:[#allocation8 + $0x3c] sm:$0xf] %v426
    $region29: #{tpu_custom_call.1} parent=1 // pred_fallthru
      _
    // Predicated region
    $region30: #{tpu_custom_call.1} parent=1 // pred_check
      _
    $region31: #{tpu_custom_call.1} parent=1 // pred_check_branch
      %460 = sbr.rel (0) target = $region33
    $region32: #{tpu_custom_call.1} parent=1 // pred_region
      %s462 = ssub.s32 1024, 1024
      %463 = vsyncadd [#allocation5], %s462
      %s464 = sshll.u32 [#allocation8], 4
      %s465 = int_to_ptr.vmem [resolvable:$true] %s464
      %470 = dma.vmem_to_hbm [thread:$0]  %s465, 1024, %s3, [#allocation5], 64, 64, 4
    $region33: #{tpu_custom_call.1} parent=1 // pred_fallthru
      _
    // Predicated region
    $region34: #{tpu_custom_call.1} parent=1 // pred_check
      _
    $region35: #{tpu_custom_call.1} parent=1 // pred_check_branch
      %472 = sbr.rel (0) target = $region37
    $region36: #{tpu_custom_call.1} parent=1 // pred_region
      %473 = dma.done [#allocation5], 1024
    $region37: #{tpu_custom_call.1} parent=1 // pred_fallthru
      _
    %474 = vsyncpa [#allocation4], 1
    %475 = vsyncpa [#allocation7], 1
    %476 = vsyncpa [#allocation5], 1

</llo_original>
